<compile_context>
chip_gen: v6e
topology: v6e:2x2x1
jax: 0.10.0
libtpu: 0.0.40
codegen_flags: <defaults>
</compile_context>

<pallas_src>
import jax
import jax.numpy as jnp
from jax.experimental import pallas as pl
from jax.experimental.pallas import tpu as pltpu


def _round_up(x, m):
    return ((x + m - 1) // m) * m


def _probe_kernel(x_ref, w_ref, b_ref, o_ref):
    # logits = X @ W^T + b ; f32 accumulation on the MXU.
    logits = jnp.dot(x_ref[...], w_ref[...],
                     preferred_element_type=jnp.float32) + b_ref[...]
    # numerically-stable softmax along the class axis (dim=1 of the 2-D input)
    m = jnp.max(logits, axis=-1, keepdims=True)
    e = jnp.exp(logits - m)
    denom = jnp.sum(e, axis=-1, keepdims=True)
    o_ref[...] = (e / denom).astype(o_ref.dtype)


def _vmem_budget(tb, e, o, in_itemsize, out_itemsize):
    """Double-buffered VMEM footprint (tile-padded to (8,128)) + slack."""
    e_t = _round_up(e, 128)
    o_t = _round_up(o, 128)
    x_tile = tb * e_t * in_itemsize
    o_tile = tb * o_t * out_itemsize
    w_tile = _round_up(e, 8) * o_t * in_itemsize
    b_tile = 8 * o_t * 4
    footprint = 2 * (x_tile + o_tile) + 2 * (w_tile + b_tile)
    # 2x slack for compiler-internal scratch; clamp to [4 MiB, 32 MiB].
    return int(min(max(2 * footprint, 4 << 20), 32 << 20))


def simple_probe(x, w, b, *, block_batch=1024, compute_dtype=jnp.float32):
    """SimpleProbe forward: softmax(x @ w.T + b, axis=1).

    x: (B, E)   w: (O, E) (torch nn.Linear layout)   b: (O,)
    """
    B, E = x.shape
    O, E2 = w.shape
    assert E == E2 and b.shape == (O,)

    # Batch tile: multiple of 8, big enough to beat ~0.35us/step overhead,
    # but keep >= ~8 grid steps at large B so v7x's two TCs both get work.
    TB = min(block_batch, _round_up(B, 8))
    if B // TB < 8:
        TB = min(max(512, _round_up(pl.cdiv(B, 8), 8)), _round_up(B, 8))
    grid = (pl.cdiv(B, TB),)

    x_c = x.astype(compute_dtype)                 # no-op when dtypes already match
    w_t = jnp.transpose(w).astype(compute_dtype)  # (E, O); tiny one-off XLA op
    b2d = b.reshape(1, O).astype(jnp.float32)     # bias stays f32

    vmem_limit = _vmem_budget(TB, E, O, jnp.dtype(compute_dtype).itemsize, 4)

    return pl.pallas_call(
        _probe_kernel,
        out_shape=jax.ShapeDtypeStruct((B, O), jnp.float32),
        grid_spec=pltpu.PrefetchScalarGridSpec(
            num_scalar_prefetch=0,
            grid=grid,
            in_specs=[
                pl.BlockSpec((TB, E), lambda i: (i, 0)),   # X: walk the batch
                pl.BlockSpec((E, O), lambda i: (0, 0)),    # W^T: pinned, resident
                pl.BlockSpec((1, O), lambda i: (0, 0)),    # bias: pinned, resident
            ],
            out_specs=pl.BlockSpec((TB, O), lambda i: (i, 0)),
        ),
        compiler_params=pltpu.CompilerParams(
            dimension_semantics=("parallel",),   # dual-TC sharding on v7x
            vmem_limit_bytes=vmem_limit,
        ),
    )(x_c, w_t, b2d)


def _reference(x, w, b):
    logits = x @ w.T + b[None, :]
    return jax.nn.softmax(logits, axis=1)


if __name__ == "__main__":
    key = jax.random.PRNGKey(0)
    k_x, k_w, k_b, k_x2 = jax.random.split(key, 4)

    embedding_dim, out_dim = 32, 16
    w = jax.random.normal(k_w, (out_dim, embedding_dim), dtype=jnp.float32) * 0.1
    b = jax.random.normal(k_b, (out_dim,), dtype=jnp.float32) * 0.1

    # Small demo batch (matches the module's 2-D input contract).
    x = jax.random.normal(k_x, (8, embedding_dim), dtype=jnp.float32)
    out = simple_probe(x, w, b)
    jax.block_until_ready(out)
    ref = _reference(x, w, b)
    assert out.shape == (8, out_dim)
    assert jnp.allclose(out, ref, atol=1e-5, rtol=1e-5)
    assert jnp.allclose(jnp.sum(out, axis=1), 1.0, atol=1e-5)

    # Larger, non-tile-multiple batch to exercise the ragged (cdiv) final block.
    x2 = jax.random.normal(k_x2, (300, embedding_dim), dtype=jnp.float32)
    out2 = simple_probe(x2, w, b)
    jax.block_until_ready(out2)
    ref2 = _reference(x2, w, b)
    assert out2.shape == (300, out_dim)
    assert jnp.allclose(out2, ref2, atol=1e-5, rtol=1e-5)
    assert jnp.allclose(jnp.sum(out2, axis=1), 1.0, atol=1e-5)

    print("KERNEL_OK")
</pallas_src>

<mosaic_0001>
module attributes {stable_mosaic.version = 11 : i64} {
  func.func @_probe_kernel(%arg0: i32, %arg1: memref<8x32xf32, #tpu.memory_space<vmem>>, %arg2: memref<32x16xf32, #tpu.memory_space<vmem>>, %arg3: memref<1x16xf32, #tpu.memory_space<vmem>>, %arg4: memref<8x16xf32, #tpu.memory_space<vmem>>) attributes {dimension_semantics = [#tpu.dimension_semantics<parallel>], iteration_bounds = array<i64: 1>, scalar_prefetch = 0 : i64, scratch_operands = 0 : i64, tpu.core_type = #tpu.core_type<tc>, window_params = [{transform_indices = @transform_0, window_bounds = array<i64: 8, 32>}, {pipeline_mode = #tpu.pipeline_mode<synchronous>, transform_indices = @transform_1, window_bounds = array<i64: 32, 16>}, {pipeline_mode = #tpu.pipeline_mode<synchronous>, transform_indices = @transform_2, window_bounds = array<i64: 1, 16>}, {transform_indices = @transform_3, window_bounds = array<i64: 8, 16>}]} {
    %c0 = arith.constant 0 : index
    %c0_0 = arith.constant 0 : index
    %0 = vector.load %arg1[%c0, %c0_0] : memref<8x32xf32, #tpu.memory_space<vmem>>, vector<8x32xf32>
    %c0_1 = arith.constant 0 : index
    %c0_2 = arith.constant 0 : index
    %1 = vector.load %arg2[%c0_1, %c0_2] : memref<32x16xf32, #tpu.memory_space<vmem>>, vector<32x16xf32>
    %cst = arith.constant dense<0.000000e+00> : vector<8x16xf32>
    %2 = tpu.matmul %0, %1, %cst {dimension_numbers = #tpu.dot_dimension_numbers<[1], [0], [0], [1], [0, 0, 1, 1], [], []>} : vector<8x32xf32>, vector<32x16xf32>, vector<8x16xf32> -> vector<8x16xf32>
    %c0_3 = arith.constant 0 : index
    %c0_4 = arith.constant 0 : index
    %3 = vector.load %arg3[%c0_3, %c0_4] : memref<1x16xf32, #tpu.memory_space<vmem>>, vector<1x16xf32>
    %4 = vector.broadcast %3 : vector<1x16xf32> to vector<8x16xf32>
    %5 = arith.addf %2, %4 : vector<8x16xf32>
    %cst_5 = arith.constant dense<0xFF800000> : vector<8xf32>
    %6 = vector.multi_reduction <maximumf>, %5, %cst_5 [1] : vector<8x16xf32> to vector<8xf32>
    %7 = vector.shape_cast %6 : vector<8xf32> to vector<8x1xf32>
    %8 = vector.broadcast %7 : vector<8x1xf32> to vector<8x16xf32>
    %9 = arith.subf %5, %8 : vector<8x16xf32>
    %10 = math.exp %9 : vector<8x16xf32>
    %cst_6 = arith.constant dense<0.000000e+00> : vector<8xf32>
    %11 = vector.multi_reduction <add>, %10, %cst_6 [1] : vector<8x16xf32> to vector<8xf32>
    %12 = vector.shape_cast %11 : vector<8xf32> to vector<8x1xf32>
    %13 = vector.broadcast %12 : vector<8x1xf32> to vector<8x16xf32>
    %14 = arith.divf %10, %13 : vector<8x16xf32>
    %c0_7 = arith.constant 0 : index
    %c0_8 = arith.constant 0 : index
    %15 = vector.load %arg4[%c0_7, %c0_8] : memref<8x16xf32, #tpu.memory_space<vmem>>, vector<8x16xf32>
    tpu.vector_store %arg4[%c0_7, %c0_8], %14 {strides = array<i32>} : memref<8x16xf32, #tpu.memory_space<vmem>>, vector<8x16xf32>,
    return
  }
  func.func @transform_0(%arg0: i32) -> (i32, i32) {
    %c0_i32 = arith.constant 0 : i32
    %c0_i32_0 = arith.constant 0 : i32
    return %arg0, %c0_i32 : i32, i32
  }
  func.func @transform_1(%arg0: i32) -> (i32, i32) {
    %c0_i32 = arith.constant 0 : i32
    %c0_i32_0 = arith.constant 0 : i32
    %c0_i32_1 = arith.constant 0 : i32
    return %c0_i32, %c0_i32_0 : i32, i32
  }
  func.func @transform_2(%arg0: i32) -> (i32, i32) {
    %c0_i32 = arith.constant 0 : i32
    %c0_i32_0 = arith.constant 0 : i32
    %c0_i32_1 = arith.constant 0 : i32
    return %c0_i32, %c0_i32_0 : i32, i32
  }
  func.func @transform_3(%arg0: i32) -> (i32, i32) {
    %c0_i32 = arith.constant 0 : i32
    %c0_i32_0 = arith.constant 0 : i32
    return %arg0, %c0_i32 : i32, i32
  }
}

</mosaic_0001>

<llo_original>
// kernel: tpu_custom_call.1
$region0: #{tpu_custom_call.1}
  #allocation0 [shape = 'u32[]', space=smem, size = 0x4, offset = 0x4, fixed_abs, tag = 'smem constant byte address 0x4 - core index']
  #allocation1 [shape = 'u32[144,128]{1,0:T(1,128)}', space=vmem, size = 0x12000, scoped, tag = 'internal scratch']
  %s0 = inlined_call_operand.vmem [shape: f32[8,32], index: 0, kind: input, shape index: {}]
  %s1 = inlined_call_operand.vmem [shape: f32[32,16], index: 1, kind: input, shape index: {}]
  %s2 = inlined_call_operand.vmem [shape: f32[1,16], index: 2, kind: input, shape index: {}]
  %s3 = inlined_call_operand.hbm [shape: f32[8,16], index: 3, kind: output, shape index: {}]
  %s4 = sld [smem:[#allocation0]]
  $region22: #{tpu_custom_call.1} parent=0
    _
  %s6 = ssub.s32 1, %s4
  %s7 = scalar_select 0, %s6, %s4
  $region1: #{tpu_custom_call.1} parent=0
    #allocation2 [shape = 'u8[4096]{0}', space=vmem, size = 0x1000, scoped, tag = 'output window, operand 0, single buffered']
    #allocation3 [shape = 's32[1]{0}', space=sflag, size = 0x4, scoped, tag = 'scoped memory for tpu_custom_call.1']
    %8 = vsyncpa [#allocation3], 0
    // Predicated region
    $region2: #{tpu_custom_call.1} parent=1 // pred_check
      _
    $region3: #{tpu_custom_call.1} parent=1 // pred_check_branch
      %10 = sbr.rel (0) target = $region5
    $region4: #{tpu_custom_call.1} parent=1 // pred_region
      _
    $region5: #{tpu_custom_call.1} parent=1 // pred_fallthru
      _
    // Predicated region
    $region6: #{tpu_custom_call.1} parent=1 // pred_check
      _
    $region7: #{tpu_custom_call.1} parent=1 // pred_check_branch
      %12 = sbr.rel (0) target = $region9
    $region8: #{tpu_custom_call.1} parent=1 // pred_region
      _
    $region9: #{tpu_custom_call.1} parent=1 // pred_fallthru
      _
    // Predicated region
    $region10: #{tpu_custom_call.1} parent=1 // pred_check
      _
    $region11: #{tpu_custom_call.1} parent=1 // pred_check_branch
      %14 = sbr.rel (0) target = $region13
    $region12: #{tpu_custom_call.1} parent=1 // pred_region
      _
    $region13: #{tpu_custom_call.1} parent=1 // pred_fallthru
      _
    %v15 = vld [vmem:[%s0] sm:$0xff]
    %v16 = vld [vmem:[%s1] sm:$0xff]
    %v17 = vld [vmem:[%s1 + $0x8] sm:$0xff]
    %v18 = vld [vmem:[%s1 + $0x10] sm:$0xff]
    %v19 = vld [vmem:[%s1 + $0x18] sm:$0xff]
    %v20 = vld [vmem:[%s2] sm:$0x1]
    %v22 = vlaneseq
    %v23 = vshrl.u32 %v22, 7
    %v24 = vsub.s32 0, %v23
    %v25 = vrot.slane %v20, %v24
    %vm27 = vcmask 261120
    %v29 = vsel %vm27, %v15, 0
    %31 = vmatprep.subr.mxu0 0.0
    %32 = vmatpush1.msra.mxu0 0.0
    %33 = vmatprep.subr.mxu0 0.0
    %34 = vmatpush1.msra.mxu0 0.0
    %35 = vmatprep.subr.mxu0 0.0
    %36 = vmatpush1.msra.mxu0 0.0
    %37 = vmatprep.subr.mxu0 0.0
    %38 = vmatpush1.msra.mxu0 0.0
    %39 = vmatprep.subr.mxu0 0.0
    %40 = vmatpush1.msra.mxu0 0.0
    %41 = vmatprep.subr.mxu0 0.0
    %42 = vmatpush1.msra.mxu0 0.0
    %43 = vmatprep.subr.mxu0 0.0
    %44 = vmatpush1.msra.mxu0 0.0
    %45 = vmatprep.subr.mxu0 0.0
    %46 = vmatpush1.msra.mxu0 0.0
    %47 = vmatprep.subr.mxu0 0.0
    %48 = vmatpush1.msra.mxu0 0.0
    %49 = vmatprep.subr.mxu0 0.0
    %50 = vmatpush1.msra.mxu0 0.0
    %51 = vmatprep.subr.mxu0 0.0
    %52 = vmatpush1.msra.mxu0 0.0
    %53 = vmatprep.subr.mxu0 0.0
    %54 = vmatpush1.msra.mxu0 0.0
    %55 = vmatprep.subr.mxu0 0.0
    %56 = vmatpush1.msra.mxu0 %v19
    %57 = vmatprep.subr.mxu0 0.0
    %58 = vmatpush1.msra.mxu0 %v18
    %59 = vmatprep.subr.mxu0 0.0
    %60 = vmatpush1.msra.mxu0 %v17
    %61 = vmatprep.subr.mxu0 0.0
    %62 = vmatpush1.msra.mxu0 %v16
    %63 = vmatprep.subr.mxu0 0.0
    %64 = vmatpush2.msra.mxu0 0.0
    %65 = vmatprep.subr.mxu0 0.0
    %66 = vmatpush2.msra.mxu0 0.0
    %67 = vmatprep.subr.mxu0 0.0
    %68 = vmatpush2.msra.mxu0 0.0
    %69 = vmatprep.subr.mxu0 0.0
    %70 = vmatpush2.msra.mxu0 0.0
    %71 = vmatprep.subr.mxu0 0.0
    %72 = vmatpush2.msra.mxu0 0.0
    %73 = vmatprep.subr.mxu0 0.0
    %74 = vmatpush2.msra.mxu0 0.0
    %75 = vmatprep.subr.mxu0 0.0
    %76 = vmatpush2.msra.mxu0 0.0
    %77 = vmatprep.subr.mxu0 0.0
    %78 = vmatpush2.msra.mxu0 0.0
    %79 = vmatprep.subr.mxu0 0.0
    %80 = vmatpush2.msra.mxu0 0.0
    %81 = vmatprep.subr.mxu0 0.0
    %82 = vmatpush2.msra.mxu0 0.0
    %83 = vmatprep.subr.mxu0 0.0
    %84 = vmatpush2.msra.mxu0 0.0
    %85 = vmatprep.subr.mxu0 0.0
    %86 = vmatpush2.msra.mxu0 0.0
    %87 = vmatprep.subr.mxu0 0.0
    %88 = vmatpush2.msra.mxu0 0.0
    %89 = vmatprep.subr.mxu0 0.0
    %90 = vmatpush2.msra.mxu0 0.0
    %91 = vmatprep.subr.mxu0 0.0
    %92 = vmatpush2.msra.mxu0 0.0
    %93 = vmatprep.subr.mxu0 0.0
    %94 = vmatpush2.msra.mxu0 0.0
    %95 = vmatprep.mubr.f32.mxu0 0.0
    %96 = vmatmul.mubr.f32.gmra.mxu0 %v29
    %v97 = vpop.f32.mrf.mxu0
    %v98 = vadd.f32 %v25, %v97
    %v99 = vpop.f32.mrf.mxu0
    %100 = vdwg.mxu0
    %vm101 = vcmask 130048
    %v102 = vsel %vm101, %v98, -inf
    %103 = vmax.xlane.f32.xlu0 %v102
    %v104 = vpop.xlane.xlu0 %103
    %v105 = vsub.f32 %v98, %v104
    %v106 = vmul.f32 %v105, 1.442695
    %v107 = vpow.pop %v106
    %v108 = vsel %vm101, %v107, 0.0
    %109 = vadd.xlane.f32.xlu0 %v108
    %v110 = vpop.xlane.xlu0 %109
    %v111 = vrcp.pop %v110
    %v112 = vmul.f32 %v107, %v111
    %113 = vst.msk [vmem:[#allocation2] sm:$0xff] %vm101, %v112
    // Predicated region
    $region14: #{tpu_custom_call.1} parent=1 // pred_check
      _
    $region15: #{tpu_custom_call.1} parent=1 // pred_check_branch
      %115 = sbr.rel (0) target = $region17
    $region16: #{tpu_custom_call.1} parent=1 // pred_region
      %s117 = ssub.s32 128, 128
      %118 = vsyncadd [#allocation3], %s117
      %s120 = sshll.u32 [#allocation2], 4
      %s121 = int_to_ptr.vmem [resolvable:$true] %s120
      %123 = dma.vmem_to_hbm [thread:$0]  %s121, 128, %s3, [#allocation3]
    $region17: #{tpu_custom_call.1} parent=1 // pred_fallthru
      _
    // Predicated region
    $region18: #{tpu_custom_call.1} parent=1 // pred_check
      _
    $region19: #{tpu_custom_call.1} parent=1 // pred_check_branch
      %125 = sbr.rel (0) target = $region21
    $region20: #{tpu_custom_call.1} parent=1 // pred_region
      %126 = dma.done [#allocation3], 128
    $region21: #{tpu_custom_call.1} parent=1 // pred_fallthru
      _
    %127 = vsyncpa [#allocation3], 1

</llo_original>
